<compile_context>
chip_gen: v5e
topology: v5e:2x2
jax: 0.10.0
libtpu: 0.0.40
codegen_flags: <defaults>
</compile_context>

<pallas_src>
import functools

import jax
import jax.numpy as jnp
import numpy as np
from jax.experimental import pallas as pl
from jax.experimental.pallas import tpu as pltpu


# ---------------------------------------------------------------------------
# helpers
# ---------------------------------------------------------------------------
def _round_up(x, m):
    return (x + m - 1) // m * m


def _pick_pixel_tile(nt, max_tile=2048):
    """Largest multiple-of-128 tile that divides nt (nt is a multiple of 128)."""
    t = max(128, (min(nt, max_tile) // 128) * 128)
    while nt % t != 0:
        t -= 128
    return t


def _pick_cout_tile(cout, max_tile=256):
    """Cout tile: full if small, else the largest multiple-of-8 divisor <= cap."""
    if cout <= max_tile:
        return cout
    t = (max_tile // 8) * 8
    while t >= 8:
        if cout % t == 0:
            return t
        t -= 8
    return cout


# ---------------------------------------------------------------------------
# Pallas kernel: fused LeakyReLU(0.2) + 4x4/stride-2 conv (4 shifted matmuls)
# ---------------------------------------------------------------------------
def _downconv_kernel(z_ref, w_ref, o_ref, slab_ref, *, tq, padq, shifts):
    """One (Cout-tile, pixel-tile) step.

    z_ref:    (4*Cin, NT+padq) bf16  phase-decomposed padded input (resident).
    w_ref:    (4, TCout, 4*Cin) bf16 per-tap weight matrices.
    o_ref:    (TCout, tq) f32        conv output on the padded output grid.
    slab_ref: (4*Cin, tq+padq) bf16  VMEM scratch: activated halo'd slab.
    """
    t = pl.program_id(1)
    base = pl.multiple_of(t * tq, tq)

    # LeakyReLU(0.2) computed once per tile on a halo'd slab; compare/select in
    # f32 (works on v5e too), cast to bf16 for the MXU.
    slab = z_ref[:, pl.ds(base, tq + padq)].astype(jnp.float32)
    slab = jnp.where(slab >= 0.0, slab, 0.2 * slab)
    slab_ref[...] = slab.astype(jnp.bfloat16)

    acc = jnp.zeros(o_ref.shape, jnp.float32)
    for tap, sh in enumerate(shifts):            # 4 static taps (a, b) in {0,1}^2
        acc += jnp.dot(w_ref[tap], slab_ref[:, pl.ds(sh, tq)],
                       preferred_element_type=jnp.float32)
    o_ref[...] = acc


# ---------------------------------------------------------------------------
# Wrapper: phase decomposition -> Pallas conv -> PixelShuffle -> skip concat
# ---------------------------------------------------------------------------
def unet_innermost_forward(x, w_down):
    """x: (B, Cin, H, W) f32; w_down: (2*inner_nc, Cin, 4, 4) f32."""
    B, Cin, H, W = x.shape
    assert H % 2 == 0 and W % 2 == 0, "stride-2 down-conv expects even H, W"
    Cout = w_down.shape[0]                       # 2 * inner_nc
    assert Cout % 4 == 0, "PixelShuffle(2) needs channels divisible by 4"
    Ho, Wo = H // 2, W // 2
    Pp = (Ho + 1) * (Wo + 1)                     # padded output grid per batch
    K4 = 4 * Cin

    # ---- space-to-depth by the stride (pure layout, ~1x input bytes) --------
    # z[(ph*2+pw)*Cin + c, b*Pp + i*(Wo+1) + j] = x_pad[b, c, 2i+ph, 2j+pw]
    xb = x.astype(jnp.bfloat16)
    xp = jnp.pad(xb, ((0, 0), (0, 0), (1, 1), (1, 1)))       # (B,Cin,2Ho+2,2Wo+2)
    z = xp.reshape(B, Cin, Ho + 1, 2, Wo + 1, 2)             # (b,c,i,ph,j,pw)
    z = jnp.transpose(z, (3, 5, 1, 0, 2, 4))                 # (ph,pw,c,b,i,j)
    z = z.reshape(K4, B * Pp)                                # pixel axis on lanes

    npix = B * Pp
    NT = _round_up(npix, 128)                    # lane-dense, lane-aligned output
    PADQ = _round_up(Wo + 2, 128)                # halo covering the 4 tap shifts
    LZ = NT + PADQ
    z = jnp.pad(z, ((0, 0), (0, LZ - npix)))

    # ---- weight: (Cout, Cin, 4, 4) -> 4 per-tap (Cout, 4*Cin) matrices ------
    # kh = 2a+ph, kw = 2b+pw; tap index = a*2+b; column = (ph*2+pw)*Cin + c.
    wt = w_down.astype(jnp.bfloat16).reshape(Cout, Cin, 2, 2, 2, 2)  # (o,c,a,ph,b,pw)
    wt = jnp.transpose(wt, (2, 4, 0, 3, 5, 1))                       # (a,b,o,ph,pw,c)
    wt = wt.reshape(4, Cout, K4)
    shifts = (0, 1, Wo + 1, Wo + 2)              # tap (a,b) -> a*(Wo+1) + b

    TQ = _pick_pixel_tile(NT)
    TCO = _pick_cout_tile(Cout)
    grid = (Cout // TCO, NT // TQ)

    # rough per-step VMEM footprint (resident z + 2x weight + 2x out + slab)
    est = (K4 * LZ * 2 + 2 * 4 * TCO * K4 * 2 + 2 * TCO * TQ * 4
           + K4 * (TQ + PADQ) * 2)
    vmem_limit = int(min(100 * 2**20, max(32 * 2**20, 4 * est)))

    kernel = functools.partial(_downconv_kernel, tq=TQ, padq=PADQ, shifts=shifts)
    conv = pl.pallas_call(
        kernel,
        out_shape=jax.ShapeDtypeStruct((Cout, NT), jnp.float32),
        grid_spec=pltpu.PrefetchScalarGridSpec(
            num_scalar_prefetch=0,
            grid=grid,
            in_specs=[
                # resident phase tensor: constant index_map -> DMA'd once
                pl.BlockSpec((K4, LZ), lambda co, t: (0, 0)),
                # per-tap weights, tiled over Cout only
                pl.BlockSpec((4, TCO, K4), lambda co, t: (0, co, 0)),
            ],
            out_specs=pl.BlockSpec((TCO, TQ), lambda co, t: (co, t)),
            scratch_shapes=[pltpu.VMEM((K4, TQ + PADQ), jnp.bfloat16)],
        ),
        compiler_params=pltpu.CompilerParams(
            dimension_semantics=("parallel", "parallel"),
            vmem_limit_bytes=vmem_limit),
    )(z, wt)

    # ---- drop padded row/col, PixelShuffle(2), skip concat (XLA layout) -----
    conv = conv[:, :npix].reshape(Cout, B, Ho + 1, Wo + 1)[:, :, :Ho, :Wo]
    Cps = Cout // 4
    y = conv.reshape(Cps, 2, 2, B, Ho, Wo)                   # (cps,s,t,b,oh,ow)
    y = jnp.transpose(y, (3, 0, 4, 1, 5, 2)).reshape(B, Cps, H, W)
    return jnp.concatenate([x, y], axis=1)


# ---------------------------------------------------------------------------
# Pure-JAX reference (independent path via lax.conv), mirrors PyTorch forward.
# Uses the same bf16-operand / f32-accumulation numerics as the kernel.
# ---------------------------------------------------------------------------
def reference_forward(x, w_down):
    xb = x.astype(jnp.bfloat16).astype(jnp.float32)
    y = jnp.where(xb >= 0, xb, 0.2 * xb).astype(jnp.bfloat16)      # LeakyReLU(0.2)
    y = jax.lax.conv_general_dilated(
        y, w_down.astype(jnp.bfloat16),
        window_strides=(2, 2), padding=((1, 1), (1, 1)),
        dimension_numbers=('NCHW', 'OIHW', 'NCHW'),
        preferred_element_type=jnp.float32,
        precision=jax.lax.Precision.HIGHEST)                        # 4x4 s2 p1, no bias
    B, C4, Ho, Wo = y.shape
    Cps = C4 // 4
    y = y.reshape(B, Cps, 2, 2, Ho, Wo)                             # PixelShuffle(2)
    y = jnp.transpose(y, (0, 1, 4, 2, 5, 3)).reshape(B, Cps, 2 * Ho, 2 * Wo)
    return jnp.concatenate([x, y], axis=1)


if __name__ == "__main__":
    # Small shapes consistent with the module: innermost block with
    # input_nc = outer_nc = 4, inner_nc = 8 (down-conv -> 16 ch, PixelShuffle
    # -> 4 ch, concat -> 8 ch output).
    B, Cin, H, W = 2, 4, 16, 16
    inner_nc = 8

    key = jax.random.PRNGKey(0)
    kx, kw = jax.random.split(key)
    x = jax.random.normal(kx, (B, Cin, H, W), dtype=jnp.float32)
    w_down = jax.random.normal(kw, (2 * inner_nc, Cin, 4, 4),
                               dtype=jnp.float32) * 0.1

    fwd = jax.jit(unet_innermost_forward)
    out = jax.block_until_ready(fwd(x, w_down))

    ref = jax.block_until_ready(reference_forward(x, w_down))
    np.testing.assert_allclose(np.asarray(out), np.asarray(ref),
                               rtol=1e-2, atol=1e-2)

    print("KERNEL_OK")
</pallas_src>

<mosaic_0001>
module attributes {stable_mosaic.version = 11 : i64} {
  func.func @_downconv_kernel(%arg0: i32, %arg1: i32, %arg2: memref<16x384xbf16, #tpu.memory_space<vmem>>, %arg3: memref<4x16x16xbf16, #tpu.memory_space<vmem>>, %arg4: memref<16x256xf32, #tpu.memory_space<vmem>>, %arg5: memref<16x384xbf16, #tpu.memory_space<vmem>>) attributes {dimension_semantics = [#tpu.dimension_semantics<parallel>, #tpu.dimension_semantics<parallel>], iteration_bounds = array<i64: 1, 1>, scalar_prefetch = 0 : i64, scratch_operands = 1 : i64, tpu.core_type = #tpu.core_type<tc>, window_params = [{pipeline_mode = #tpu.pipeline_mode<synchronous>, transform_indices = @transform_0, window_bounds = array<i64: 16, 384>}, {transform_indices = @transform_1, window_bounds = array<i64: 4, 16, 16>}, {transform_indices = @transform_2, window_bounds = array<i64: 16, 256>}]} {
    %c256_i32 = arith.constant 256 : i32
    %0 = arith.muli %arg1, %c256_i32 : i32
    %1 = tpu.assume_multiple %0, 256 : i32
    %c0 = arith.constant 0 : index
    %2 = arith.index_cast %1 : i32 to index
    %3 = vector.load %arg2[%c0, %2] : memref<16x384xbf16, #tpu.memory_space<vmem>>, vector<16x384xbf16>
    %4 = arith.extf %3 : vector<16x384xbf16> to vector<16x384xf32>
    %cst = arith.constant 0.000000e+00 : f32
    %5 = vector.broadcast %cst : f32 to vector<16x384xf32>
    %6 = arith.cmpf oge, %4, %5 : vector<16x384xf32>
    %cst_0 = arith.constant 2.000000e-01 : f32
    %7 = vector.broadcast %cst_0 : f32 to vector<16x384xf32>
    %8 = arith.mulf %7, %4 : vector<16x384xf32>
    %9 = arith.select %6, %4, %8 : vector<16x384xi1>, vector<16x384xf32>
    %10 = arith.truncf %9 : vector<16x384xf32> to vector<16x384xbf16>
    %c0_1 = arith.constant 0 : index
    %c0_2 = arith.constant 0 : index
    %11 = vector.load %arg5[%c0_1, %c0_2] : memref<16x384xbf16, #tpu.memory_space<vmem>>, vector<16x384xbf16>
    tpu.vector_store %arg5[%c0_1, %c0_2], %10 {strides = array<i32>} : memref<16x384xbf16, #tpu.memory_space<vmem>>, vector<16x384xbf16>,
    %cst_3 = arith.constant 0.000000e+00 : f32
    %12 = vector.broadcast %cst_3 : f32 to vector<16x256xf32>
    %c0_4 = arith.constant 0 : index
    %c0_5 = arith.constant 0 : index
    %c0_6 = arith.constant 0 : index
    %13 = vector.load %arg3[%c0_4, %c0_5, %c0_6] : memref<4x16x16xbf16, #tpu.memory_space<vmem>>, vector<1x16x16xbf16>
    %14 = vector.shape_cast %13 : vector<1x16x16xbf16> to vector<16x16xbf16>
    %c0_7 = arith.constant 0 : index
    %c0_8 = arith.constant 0 : index
    %15 = vector.load %arg5[%c0_7, %c0_8] : memref<16x384xbf16, #tpu.memory_space<vmem>>, vector<16x256xbf16>
    %cst_9 = arith.constant dense<0.000000e+00> : vector<16x256xf32>
    %16 = tpu.matmul %14, %15, %cst_9 {dimension_numbers = #tpu.dot_dimension_numbers<[1], [0], [0], [1], [0, 0, 1, 1], [], []>} : vector<16x16xbf16>, vector<16x256xbf16>, vector<16x256xf32> -> vector<16x256xf32>
    %17 = arith.addf %12, %16 : vector<16x256xf32>
    %c1 = arith.constant 1 : index
    %c0_10 = arith.constant 0 : index
    %c0_11 = arith.constant 0 : index
    %18 = vector.load %arg3[%c1, %c0_10, %c0_11] : memref<4x16x16xbf16, #tpu.memory_space<vmem>>, vector<1x16x16xbf16>
    %19 = vector.shape_cast %18 : vector<1x16x16xbf16> to vector<16x16xbf16>
    %c0_12 = arith.constant 0 : index
    %c1_13 = arith.constant 1 : index
    %20 = vector.load %arg5[%c0_12, %c1_13] : memref<16x384xbf16, #tpu.memory_space<vmem>>, vector<16x256xbf16>
    %cst_14 = arith.constant dense<0.000000e+00> : vector<16x256xf32>
    %21 = tpu.matmul %19, %20, %cst_14 {dimension_numbers = #tpu.dot_dimension_numbers<[1], [0], [0], [1], [0, 0, 1, 1], [], []>} : vector<16x16xbf16>, vector<16x256xbf16>, vector<16x256xf32> -> vector<16x256xf32>
    %22 = arith.addf %17, %21 : vector<16x256xf32>
    %c2 = arith.constant 2 : index
    %c0_15 = arith.constant 0 : index
    %c0_16 = arith.constant 0 : index
    %23 = vector.load %arg3[%c2, %c0_15, %c0_16] : memref<4x16x16xbf16, #tpu.memory_space<vmem>>, vector<1x16x16xbf16>
    %24 = vector.shape_cast %23 : vector<1x16x16xbf16> to vector<16x16xbf16>
    %c0_17 = arith.constant 0 : index
    %c9 = arith.constant 9 : index
    %25 = vector.load %arg5[%c0_17, %c9] : memref<16x384xbf16, #tpu.memory_space<vmem>>, vector<16x256xbf16>
    %cst_18 = arith.constant dense<0.000000e+00> : vector<16x256xf32>
    %26 = tpu.matmul %24, %25, %cst_18 {dimension_numbers = #tpu.dot_dimension_numbers<[1], [0], [0], [1], [0, 0, 1, 1], [], []>} : vector<16x16xbf16>, vector<16x256xbf16>, vector<16x256xf32> -> vector<16x256xf32>
    %27 = arith.addf %22, %26 : vector<16x256xf32>
    %c3 = arith.constant 3 : index
    %c0_19 = arith.constant 0 : index
    %c0_20 = arith.constant 0 : index
    %28 = vector.load %arg3[%c3, %c0_19, %c0_20] : memref<4x16x16xbf16, #tpu.memory_space<vmem>>, vector<1x16x16xbf16>
    %29 = vector.shape_cast %28 : vector<1x16x16xbf16> to vector<16x16xbf16>
    %c0_21 = arith.constant 0 : index
    %c10 = arith.constant 10 : index
    %30 = vector.load %arg5[%c0_21, %c10] : memref<16x384xbf16, #tpu.memory_space<vmem>>, vector<16x256xbf16>
    %cst_22 = arith.constant dense<0.000000e+00> : vector<16x256xf32>
    %31 = tpu.matmul %29, %30, %cst_22 {dimension_numbers = #tpu.dot_dimension_numbers<[1], [0], [0], [1], [0, 0, 1, 1], [], []>} : vector<16x16xbf16>, vector<16x256xbf16>, vector<16x256xf32> -> vector<16x256xf32>
    %32 = arith.addf %27, %31 : vector<16x256xf32>
    %c0_23 = arith.constant 0 : index
    %c0_24 = arith.constant 0 : index
    %33 = vector.load %arg4[%c0_23, %c0_24] : memref<16x256xf32, #tpu.memory_space<vmem>>, vector<16x256xf32>
    tpu.vector_store %arg4[%c0_23, %c0_24], %32 {strides = array<i32>} : memref<16x256xf32, #tpu.memory_space<vmem>>, vector<16x256xf32>,
    return
  }
  func.func @transform_0(%arg0: i32, %arg1: i32) -> (i32, i32) {
    %c0_i32 = arith.constant 0 : i32
    %c0_i32_0 = arith.constant 0 : i32
    %c0_i32_1 = arith.constant 0 : i32
    return %c0_i32, %c0_i32_0 : i32, i32
  }
  func.func @transform_1(%arg0: i32, %arg1: i32) -> (i32, i32, i32) {
    %c0_i32 = arith.constant 0 : i32
    %c0_i32_0 = arith.constant 0 : i32
    %c0_i32_1 = arith.constant 0 : i32
    return %c0_i32, %arg0, %c0_i32_0 : i32, i32, i32
  }
  func.func @transform_2(%arg0: i32, %arg1: i32) -> (i32, i32) {
    %c0_i32 = arith.constant 0 : i32
    return %arg0, %arg1 : i32, i32
  }
}

</mosaic_0001>

<llo_original>
// kernel: unet_innermost_forward.1
$region0: #{unet_innermost_forward.1}
  #allocation0 [shape = 'u32[]', space=smem, size = 0x4, offset = 0x4, fixed_abs, tag = 'smem constant byte address 0x4 - core index']
  #allocation1 [shape = 'u32[72,128]{1,0:T(1,128)}', space=vmem, size = 0x9000, scoped, tag = 'internal scratch']
  #allocation2 [shape = 'bf16[16,384]{1,0:T(8,128)(2,1)}', space=vmem, size = 0x3000, scoped, tag = 'scratch operand']
  %s0 = inlined_call_operand.vmem [shape: bf16[16,384], index: 0, kind: input, shape index: {}]
  %s1 = inlined_call_operand.vmem [shape: bf16[4,16,16], index: 1, kind: input, shape index: {}]
  %s2 = inlined_call_operand.vmem [shape: f32[16,256], index: 2, kind: output, shape index: {}]
  %s3 = sld [smem:[#allocation0]]
  $region18: #{unet_innermost_forward.1} parent=0
    _
  %s5 = ssub.s32 1, %s3
  %s6 = scalar_select 0, %s5, %s3
  // Predicated region
  $region2: #{unet_innermost_forward.1} parent=0 // pred_check
    _
  $region3: #{unet_innermost_forward.1} parent=0 // pred_check_branch
    %8 = sbr.rel (0) target = $region5
  $region4: #{unet_innermost_forward.1} parent=0 // pred_region
    _
  $region5: #{unet_innermost_forward.1} parent=0 // pred_fallthru
    _
  // Predicated region
  $region6: #{unet_innermost_forward.1} parent=0 // pred_check
    _
  $region7: #{unet_innermost_forward.1} parent=0 // pred_check_branch
    %10 = sbr.rel (0) target = $region9
  $region8: #{unet_innermost_forward.1} parent=0 // pred_region
    _
  $region9: #{unet_innermost_forward.1} parent=0 // pred_fallthru
    _
  %s12 = smul.u32 0, 256
  %s13 = sshra.s32 %s12, 7
  %s14 = sand.u32 %s12, 127
  %s15 = smul.addr %s13, 4
  %s16 = scalar_lea.vmem %s0, %s15
  %v17 = vld [vmem:[%s16] sm:$0xff]
  %v18 = vld [vmem:[%s16 + $0x8] sm:$0xf]
  %v19 = vld [vmem:[%s16 + $0xc] sm:$0xff]
  %v20 = vld [vmem:[%s16 + $0x14] sm:$0xf]
  %v21 = vunpack.c.l.bf16 %v17
  %v22 = vunpack.c.h.bf16 %v17
  %v23 = vunpack.c.l.bf16 %v18
  %v24 = vunpack.c.l.bf16 %v19
  %v25 = vunpack.c.h.bf16 %v19
  %v26 = vunpack.c.l.bf16 %v20
  %vm27 = vcmp.ge.f32.partialorder %v21, 0.0
  %vm28 = vcmp.ge.f32.partialorder %v22, 0.0
  %vm29 = vcmp.ge.f32.partialorder %v23, 0.0
  %vm30 = vcmp.ge.f32.partialorder %v24, 0.0
  %vm31 = vcmp.ge.f32.partialorder %v25, 0.0
  %vm32 = vcmp.ge.f32.partialorder %v26, 0.0
  %v33 = vmul.f32 %v21, 0.2
  %v34 = vmul.f32 %v22, 0.2
  %v35 = vmul.f32 %v23, 0.2
  %v36 = vmul.f32 %v24, 0.2
  %v37 = vmul.f32 %v25, 0.2
  %v38 = vmul.f32 %v26, 0.2
  %v39 = vsel %vm27, %v21, %v33
  %v40 = vsel %vm28, %v22, %v34
  %v41 = vsel %vm29, %v23, %v35
  %v42 = vsel %vm30, %v24, %v36
  %v43 = vsel %vm31, %v25, %v37
  %v44 = vsel %vm32, %v26, %v38
  %v45 = vpack.c.bf16 %v40, %v39
  %v46 = vpack.c.bf16 %v41, %v41
  %v47 = vpack.c.bf16 %v43, %v42
  %v48 = vpack.c.bf16 %v44, %v44
  %49 = vst [vmem:[#allocation2] sm:$0xff] %v45
  %50 = vst [vmem:[#allocation2 + $0x8] sm:$0xf] %v46
  %51 = vst [vmem:[#allocation2 + $0xc] sm:$0xff] %v47
  %52 = vst [vmem:[#allocation2 + $0x14] sm:$0xf] %v48
  %v53 = vld [vmem:[%s1] sm:$0xf]
  %v54 = vld [vmem:[%s1 + $0x4] sm:$0xf]
  %v55 = vld [vmem:[#allocation2] sm:$0xff]
  %v56 = vld [vmem:[#allocation2 + $0xc] sm:$0xff]
  %s57 = scalar_lea.vmem %s1, 8
  %v58 = vld [vmem:[%s57] sm:$0xf]
  %v59 = vld [vmem:[%s57 + $0x4] sm:$0xf]
  %v60 = vld [vmem:[#allocation2] sm:$0xff]
  %v61 = vld [vmem:[#allocation2 + $0x8] sm:$0xf]
  %v62 = vld [vmem:[#allocation2 + $0xc] sm:$0xff]
  %v63 = vld [vmem:[#allocation2 + $0x14] sm:$0xf]
  %v66 = vunpack.c.l.b16 %v58
  %v67 = vunpack.c.l.b16 %v59
  %v68 = vpack.c.b16 %v67, %v66
  %v73 = vunpack.c.l.b16 %v60
  %v74 = vunpack.c.h.b16 %v60
  %v75 = vunpack.c.l.b16 %v61
  %v76 = vunpack.c.l.b16 %v62
  %v77 = vunpack.c.h.b16 %v62
  %v78 = vunpack.c.l.b16 %v63
  %v79 = vpack.c.b16 %v76, %v73
  %v80 = vpack.c.b16 %v77, %v74
  %v81 = vpack.c.b16 %v78, %v75
  %82 = vrot.lane.b32.xlu0 %v79, 127
  %v83 = vpop.permute.xlu0 %82
  %84 = vrot.lane.b32.xlu0 %v80, 127
  %v85 = vpop.permute.xlu0 %84
  %86 = vrot.lane.b32.xlu0 %v81, 127
  %v87 = vpop.permute.xlu0 %86
  %vm88 = vcmask 1039360
  %v89 = vsel %vm88, %v83, %v85
  %v90 = vsel %vm88, %v85, %v87
  %vm93 = vcmask 130048
  %v95 = vsel %vm93, %v68, 0
  %97 = vmatpush.bf16.msra.mxu0 0
  %98 = vmatpush.bf16.msra.mxu0 0
  %99 = vmatpush.bf16.msra.mxu0 0
  %100 = vmatpush.bf16.msra.mxu0 0
  %101 = vmatpush.bf16.msra.mxu0 0
  %102 = vmatpush.bf16.msra.mxu0 0
  %103 = vmatpush.bf16.msra.mxu0 0
  %104 = vmatpush.bf16.msra.mxu0 %v89
  %105 = vmatmul.bf16.gmra.mxu0 %v95
  %v106 = vpop.f32.mrf.mxu0
  %v107 = vadd.f32 0.0, %v106
  %v108 = vpop.f32.mrf.mxu0
  %v109 = vadd.f32 0.0, %v108
  %110 = vdwg.mxu0
  %111 = vmatpush.bf16.msra.mxu0 0
  %112 = vmatpush.bf16.msra.mxu0 0
  %113 = vmatpush.bf16.msra.mxu0 0
  %114 = vmatpush.bf16.msra.mxu0 0
  %115 = vmatpush.bf16.msra.mxu0 0
  %116 = vmatpush.bf16.msra.mxu0 0
  %117 = vmatpush.bf16.msra.mxu0 0
  %118 = vmatpush.bf16.msra.mxu0 %v90
  %119 = vmatmul.bf16.gmra.mxu0 %v95
  %v120 = vpop.f32.mrf.mxu0
  %v121 = vadd.f32 0.0, %v120
  %v122 = vpop.f32.mrf.mxu0
  %v123 = vadd.f32 0.0, %v122
  %124 = vdwg.mxu0
  %v127 = vunpack.c.l.b16 %v53
  %v128 = vunpack.c.l.b16 %v54
  %v129 = vpack.c.b16 %v128, %v127
  %v132 = vunpack.c.l.b16 %v55
  %v133 = vunpack.c.h.b16 %v55
  %v134 = vunpack.c.l.b16 %v56
  %v135 = vunpack.c.h.b16 %v56
  %v136 = vpack.c.b16 %v134, %v132
  %v137 = vpack.c.b16 %v135, %v133
  %v141 = vsel %vm93, %v129, 0
  %143 = vmatpush.bf16.msra.mxu0 0
  %144 = vmatpush.bf16.msra.mxu0 0
  %145 = vmatpush.bf16.msra.mxu0 0
  %146 = vmatpush.bf16.msra.mxu0 0
  %147 = vmatpush.bf16.msra.mxu0 0
  %148 = vmatpush.bf16.msra.mxu0 0
  %149 = vmatpush.bf16.msra.mxu0 0
  %150 = vmatpush.bf16.msra.mxu0 %v136
  %151 = vmatmul.bf16.gmra.mxu0 %v141
  %v152 = vpop.f32.mrf.mxu0
  %v153 = vadd.f32 %v107, %v152
  %v154 = vpop.f32.mrf.mxu0
  %v155 = vadd.f32 %v109, %v154
  %156 = vdwg.mxu0
  %157 = vmatpush.bf16.msra.mxu0 0
  %158 = vmatpush.bf16.msra.mxu0 0
  %159 = vmatpush.bf16.msra.mxu0 0
  %160 = vmatpush.bf16.msra.mxu0 0
  %161 = vmatpush.bf16.msra.mxu0 0
  %162 = vmatpush.bf16.msra.mxu0 0
  %163 = vmatpush.bf16.msra.mxu0 0
  %164 = vmatpush.bf16.msra.mxu0 %v137
  %165 = vmatmul.bf16.gmra.mxu0 %v141
  %v166 = vpop.f32.mrf.mxu0
  %v167 = vadd.f32 %v121, %v166
  %v168 = vpop.f32.mrf.mxu0
  %v169 = vadd.f32 %v123, %v168
  %170 = vdwg.mxu0
  %s171 = scalar_lea.vmem %s1, 16
  %v172 = vld [vmem:[%s171] sm:$0xf]
  %v173 = vld [vmem:[%s171 + $0x4] sm:$0xf]
  %v176 = vunpack.c.l.b16 %v172
  %v177 = vunpack.c.l.b16 %v173
  %v178 = vpack.c.b16 %v177, %v176
  %179 = vrot.lane.b32.xlu0 %v79, 119
  %v180 = vpop.permute.xlu0 %179
  %181 = vrot.lane.b32.xlu0 %v80, 119
  %v182 = vpop.permute.xlu0 %181
  %183 = vrot.lane.b32.xlu0 %v81, 119
  %v184 = vpop.permute.xlu0 %183
  %vm185 = vcmask 973824
  %v186 = vsel %vm185, %v180, %v182
  %v187 = vsel %vm185, %v182, %v184
  %v191 = vsel %vm93, %v178, 0
  %193 = vmatpush.bf16.msra.mxu0 0
  %194 = vmatpush.bf16.msra.mxu0 0
  %195 = vmatpush.bf16.msra.mxu0 0
  %196 = vmatpush.bf16.msra.mxu0 0
  %197 = vmatpush.bf16.msra.mxu0 0
  %198 = vmatpush.bf16.msra.mxu0 0
  %199 = vmatpush.bf16.msra.mxu0 0
  %200 = vmatpush.bf16.msra.mxu0 %v186
  %201 = vmatmul.bf16.gmra.mxu0 %v191
  %v202 = vpop.f32.mrf.mxu0
  %v203 = vadd.f32 0.0, %v202
  %v204 = vpop.f32.mrf.mxu0
  %v205 = vadd.f32 0.0, %v204
  %206 = vdwg.mxu0
  %207 = vmatpush.bf16.msra.mxu0 0
  %208 = vmatpush.bf16.msra.mxu0 0
  %209 = vmatpush.bf16.msra.mxu0 0
  %210 = vmatpush.bf16.msra.mxu0 0
  %211 = vmatpush.bf16.msra.mxu0 0
  %212 = vmatpush.bf16.msra.mxu0 0
  %213 = vmatpush.bf16.msra.mxu0 0
  %214 = vmatpush.bf16.msra.mxu0 %v187
  %215 = vmatmul.bf16.gmra.mxu0 %v191
  %v216 = vpop.f32.mrf.mxu0
  %v217 = vadd.f32 0.0, %v216
  %v218 = vpop.f32.mrf.mxu0
  %v219 = vadd.f32 0.0, %v218
  %220 = vdwg.mxu0
  %v221 = vadd.f32 %v153, %v203
  %v222 = vadd.f32 %v167, %v217
  %v223 = vadd.f32 %v155, %v205
  %v224 = vadd.f32 %v169, %v219
  %s225 = scalar_lea.vmem %s1, 24
  %v226 = vld [vmem:[%s225] sm:$0xf]
  %v227 = vld [vmem:[%s225 + $0x4] sm:$0xf]
  %v230 = vunpack.c.l.b16 %v226
  %v231 = vunpack.c.l.b16 %v227
  %v232 = vpack.c.b16 %v231, %v230
  %233 = vrot.lane.b32.xlu0 %v79, 118
  %v234 = vpop.permute.xlu0 %233
  %235 = vrot.lane.b32.xlu0 %v80, 118
  %v236 = vpop.permute.xlu0 %235
  %237 = vrot.lane.b32.xlu0 %v81, 118
  %v238 = vpop.permute.xlu0 %237
  %vm239 = vcmask 965632
  %v240 = vsel %vm239, %v234, %v236
  %v241 = vsel %vm239, %v236, %v238
  %v245 = vsel %vm93, %v232, 0
  %247 = vmatpush.bf16.msra.mxu0 0
  %248 = vmatpush.bf16.msra.mxu0 0
  %249 = vmatpush.bf16.msra.mxu0 0
  %250 = vmatpush.bf16.msra.mxu0 0
  %251 = vmatpush.bf16.msra.mxu0 0
  %252 = vmatpush.bf16.msra.mxu0 0
  %253 = vmatpush.bf16.msra.mxu0 0
  %254 = vmatpush.bf16.msra.mxu0 %v240
  %255 = vmatmul.bf16.gmra.mxu0 %v245
  %v256 = vpop.f32.mrf.mxu0
  %v257 = vadd.f32 0.0, %v256
  %v258 = vpop.f32.mrf.mxu0
  %v259 = vadd.f32 0.0, %v258
  %260 = vdwg.mxu0
  %261 = vmatpush.bf16.msra.mxu0 0
  %262 = vmatpush.bf16.msra.mxu0 0
  %263 = vmatpush.bf16.msra.mxu0 0
  %264 = vmatpush.bf16.msra.mxu0 0
  %265 = vmatpush.bf16.msra.mxu0 0
  %266 = vmatpush.bf16.msra.mxu0 0
  %267 = vmatpush.bf16.msra.mxu0 0
  %268 = vmatpush.bf16.msra.mxu0 %v241
  %269 = vmatmul.bf16.gmra.mxu0 %v245
  %v270 = vpop.f32.mrf.mxu0
  %v271 = vadd.f32 0.0, %v270
  %v272 = vpop.f32.mrf.mxu0
  %v273 = vadd.f32 0.0, %v272
  %274 = vdwg.mxu0
  %v275 = vadd.f32 %v221, %v257
  %v276 = vadd.f32 %v222, %v271
  %v277 = vadd.f32 %v223, %v259
  %v278 = vadd.f32 %v224, %v273
  %279 = vst [vmem:[%s2] sm:$0xff] %v275
  %280 = vst [vmem:[%s2 + $0x8] sm:$0xff] %v276
  %281 = vst [vmem:[%s2 + $0x10] sm:$0xff] %v277
  %282 = vst [vmem:[%s2 + $0x18] sm:$0xff] %v278
  // Predicated region
  $region10: #{unet_innermost_forward.1} parent=0 // pred_check
    _
  $region11: #{unet_innermost_forward.1} parent=0 // pred_check_branch
    %284 = sbr.rel (0) target = $region13
  $region12: #{unet_innermost_forward.1} parent=0 // pred_region
    _
  $region13: #{unet_innermost_forward.1} parent=0 // pred_fallthru
    _
  // Predicated region
  $region14: #{unet_innermost_forward.1} parent=0 // pred_check
    _
  $region15: #{unet_innermost_forward.1} parent=0 // pred_check_branch
    %286 = sbr.rel (0) target = $region17
  $region16: #{unet_innermost_forward.1} parent=0 // pred_region
    _
  $region17: #{unet_innermost_forward.1} parent=0 // pred_fallthru
    _

</llo_original>
